<compile_context>
chip_gen: v6e
topology: v6e:2x2x1
jax: 0.10.0
libtpu: 0.0.40
codegen_flags: <defaults>
</compile_context>

<pallas_src>
from functools import partial

import numpy as np
import jax
import jax.numpy as jnp
from jax.experimental import pallas as pl
from jax.experimental.pallas import tpu as pltpu


# ----------------------------- fused Pallas kernel ---------------------------

def _fused_disc_kernel(x_ref, w1_ref, g1_ref, b1_ref,
                       w2_ref, g2_ref, b2_ref,
                       wf_ref, bf_ref,
                       full_ref, info_ref):
    """Whole Discriminator forward for one row-tile of the batch.

    x_ref    : (TB, D0)  flattened input rows (f32)
    w1_ref   : (D0, D1)  unrolled conv1 weights (matmul dtype)
    w2_ref   : (D1, D2)  unrolled conv2 weights (matmul dtype)
    g*/b*    : (1, D*)   LayerNorm affine params (f32)
    wf_ref   : (1, D2)   flattened final-conv weight (f32)
    bf_ref   : (1, 1)    final-conv bias (f32)
    full_ref : (TB, 1)   seq(x) output
    info_ref : (TB, D2)  seq_info(x) output (features after 2nd LayerNorm)
    """
    x = x_ref[...].astype(jnp.float32)

    # ---- Conv1 (stride-2 conv as unrolled dense matmul on the MXU) ----
    w1 = w1_ref[...]
    y1 = jnp.dot(x.astype(w1.dtype), w1, preferred_element_type=jnp.float32)

    # ---- LayerNorm([C1, s1, s1]) + LeakyReLU(0.2), f32 statistics ----
    mu1 = jnp.mean(y1, axis=-1, keepdims=True)
    c1 = y1 - mu1
    var1 = jnp.mean(c1 * c1, axis=-1, keepdims=True)
    h1 = c1 * jax.lax.rsqrt(var1 + 1e-5) * g1_ref[...] + b1_ref[...]
    a1 = jnp.where(h1 >= 0.0, h1, 0.2 * h1)   # ln1 itself is never stored

    # ---- Conv2 (unrolled dense matmul) ----
    w2 = w2_ref[...]
    y2 = jnp.dot(a1.astype(w2.dtype), w2, preferred_element_type=jnp.float32)

    # ---- LayerNorm([C2, s2, s2]) (seq_info output) + LeakyReLU(0.2) ----
    mu2 = jnp.mean(y2, axis=-1, keepdims=True)
    c2 = y2 - mu2
    var2 = jnp.mean(c2 * c2, axis=-1, keepdims=True)
    ln2 = c2 * jax.lax.rsqrt(var2 + 1e-5) * g2_ref[...] + b2_ref[...]
    info_ref[...] = ln2
    a2 = jnp.where(ln2 >= 0.0, ln2, 0.2 * ln2)

    # ---- Final Conv2d(C2, 1, s2) == per-row dot: VPU mul + lane reduce ----
    full_ref[...] = jnp.sum(a2 * wf_ref[...], axis=-1, keepdims=True) + bf_ref[...]


# ------------------------ weight preprocessing (wrapper) ---------------------

def _conv_unroll_matrix(w_oihw, H, W, stride, pad):
    """Dense matrix M (Cin*H*W, Cout*Ho*Wo) with x_flat @ M == NCHW-flattened
    Conv2d(w, stride, pad) output.  Batch-independent weight transform;
    index maps are numpy constants, only a tiny gather/mask runs in XLA."""
    Cout, Cin, K, _ = w_oihw.shape
    Ho = (H + 2 * pad - K) // stride + 1
    Wo = (W + 2 * pad - K) // stride + 1

    oi = np.arange(Ho)[:, None, None, None]
    oj = np.arange(Wo)[None, :, None, None]
    ii = np.arange(H)[None, None, :, None]
    ij = np.arange(W)[None, None, None, :]
    ki = ii - oi * stride + pad            # (Ho, 1, H, 1)
    kj = ij - oj * stride + pad            # (1, Wo, 1, W)
    valid = ((ki >= 0) & (ki < K)) & ((kj >= 0) & (kj < K))   # (Ho, Wo, H, W)
    ki_c = np.clip(ki, 0, K - 1)
    kj_c = np.clip(kj, 0, K - 1)

    # (Cout, Cin, Ho, Wo, H, W)
    m = w_oihw[:, :, ki_c, kj_c] * jnp.asarray(valid, dtype=w_oihw.dtype)[None, None]
    # -> (Cin, H, W, Cout, Ho, Wo) -> (Cin*H*W, Cout*Ho*Wo)
    m = m.transpose(1, 4, 5, 0, 2, 3).reshape(Cin * H * W, Cout * Ho * Wo)
    return m


# ------------------------------ forward wrapper ------------------------------

def discriminator_forward(x_nchw, params, *, matmul_dtype=jnp.bfloat16):
    B, _, side, _ = x_nchw.shape
    assert side % 4 == 0
    C1 = params["conv1_w"].shape[0]
    C2 = params["conv2_w"].shape[0]
    s1, s2 = side // 2, side // 4

    D0 = side * side
    D1 = C1 * s1 * s1
    D2 = C2 * s2 * s2

    # ---- batch-independent weight preprocessing (tiny) ----
    w1u = _conv_unroll_matrix(params["conv1_w"], side, side, 2, 1).astype(matmul_dtype)
    w2u = _conv_unroll_matrix(params["conv2_w"], s1, s1, 2, 1).astype(matmul_dtype)
    g1 = params["ln1_g"].reshape(1, D1).astype(jnp.float32)
    b1 = params["ln1_b"].reshape(1, D1).astype(jnp.float32)
    g2 = params["ln2_g"].reshape(1, D2).astype(jnp.float32)
    b2 = params["ln2_b"].reshape(1, D2).astype(jnp.float32)
    wf = params["convf_w"].reshape(1, D2).astype(jnp.float32)
    bf = params["convf_b"].reshape(1, 1).astype(jnp.float32)

    x_flat = x_nchw.reshape(B, D0).astype(jnp.float32)

    # Row tile over the batch: multiple of 8 when possible (pipelining /
    # megacore at real batch sizes), otherwise the whole (tiny) batch.
    tile_b = B
    for cand in (128, 64, 32, 16, 8):
        if B % cand == 0:
            tile_b = cand
            break
    grid = (B // tile_b,)

    def row_spec(d):
        return pl.BlockSpec((tile_b, d), lambda i: (i, 0))

    def rep_spec(r, c):
        return pl.BlockSpec((r, c), lambda i: (0, 0))

    out_full, out_info = pl.pallas_call(
        _fused_disc_kernel,
        grid=grid,
        in_specs=[
            row_spec(D0),
            rep_spec(D0, D1), rep_spec(1, D1), rep_spec(1, D1),
            rep_spec(D1, D2), rep_spec(1, D2), rep_spec(1, D2),
            rep_spec(1, D2), rep_spec(1, 1),
        ],
        out_specs=(row_spec(1), row_spec(D2)),
        out_shape=(jax.ShapeDtypeStruct((B, 1), jnp.float32),
                   jax.ShapeDtypeStruct((B, D2), jnp.float32)),
        compiler_params=pltpu.CompilerParams(
            dimension_semantics=("parallel",),          # v7x: 2 TCs split rows
            vmem_limit_bytes=32 * 1024 * 1024,          # explicit (v5e default 16 MiB)
        ),
    )(x_flat, w1u, g1, b1, w2u, g2, b2, wf, bf)

    return out_full.reshape(B, 1, 1, 1), out_info.reshape(B, C2, s2, s2)


# --------------------------- reference (pure JAX) ----------------------------

def _reference_forward(x, params):
    def conv(x, w, stride, pad, bias=None):
        y = jax.lax.conv_general_dilated(
            x, w, window_strides=(stride, stride),
            padding=[(pad, pad), (pad, pad)],
            dimension_numbers=("NCHW", "OIHW", "NCHW"))
        if bias is not None:
            y = y + bias.reshape(1, -1, 1, 1)
        return y

    def layernorm(x, g, b):
        B = x.shape[0]
        xf = x.reshape(B, -1)
        mean = xf.mean(-1, keepdims=True)
        var = ((xf - mean) ** 2).mean(-1, keepdims=True)
        y = (xf - mean) / jnp.sqrt(var + 1e-5)
        return y.reshape(x.shape) * g[None] + b[None]

    lrelu = lambda v: jnp.where(v >= 0, v, 0.2 * v)

    h = conv(x, params["conv1_w"], 2, 1)
    h = lrelu(layernorm(h, params["ln1_g"], params["ln1_b"]))
    h = conv(h, params["conv2_w"], 2, 1)
    info = layernorm(h, params["ln2_g"], params["ln2_b"])
    h = lrelu(info)
    out = conv(h, params["convf_w"], 1, 0, params["convf_b"])
    return out, info


# ----------------------------------- main ------------------------------------

def make_params(key, side=8, num_channels=4):
    C1, C2 = num_channels, num_channels * 2
    s1, s2 = side // 2, side // 4
    ks = jax.random.split(key, 8)
    f32 = jnp.float32
    return {
        "conv1_w": jax.random.normal(ks[0], (C1, 1, 4, 4), f32) * 0.1,
        "ln1_g": 1.0 + 0.05 * jax.random.normal(ks[1], (C1, s1, s1), f32),
        "ln1_b": 0.05 * jax.random.normal(ks[2], (C1, s1, s1), f32),
        "conv2_w": jax.random.normal(ks[3], (C2, C1, 4, 4), f32) * 0.1,
        "ln2_g": 1.0 + 0.05 * jax.random.normal(ks[4], (C2, s2, s2), f32),
        "ln2_b": 0.05 * jax.random.normal(ks[5], (C2, s2, s2), f32),
        "convf_w": jax.random.normal(ks[6], (1, C2, s2, s2), f32) * 0.1,
        "convf_b": 0.05 * jax.random.normal(ks[7], (1,), f32),
    }


if __name__ == "__main__":
    key = jax.random.PRNGKey(0)
    k_x, k_p = jax.random.split(key)

    side, num_channels, batch = 8, 4, 2
    x = jax.random.normal(k_x, (batch, 1, side, side), jnp.float32)
    params = make_params(k_p, side=side, num_channels=num_channels)

    ref_full, ref_info = _reference_forward(x, params)

    # Strict check: f32 matmul path must match the PyTorch graph tightly.
    fwd_f32 = jax.jit(partial(discriminator_forward, matmul_dtype=jnp.float32))
    out_full32, out_info32 = fwd_f32(x, params)
    jax.block_until_ready((out_full32, out_info32))
    assert out_full32.shape == (batch, 1, 1, 1)
    assert out_info32.shape == (batch, 2 * num_channels, side // 4, side // 4)
    assert jnp.allclose(out_full32, ref_full, atol=1e-4, rtol=1e-4)
    assert jnp.allclose(out_info32, ref_info, atol=1e-4, rtol=1e-4)

    # Recommended fast path: bf16 MXU inputs, f32 LayerNorm statistics
    # (loose tolerance commensurate with bf16 precision).
    fwd_bf16 = jax.jit(partial(discriminator_forward, matmul_dtype=jnp.bfloat16))
    out_full, out_info = fwd_bf16(x, params)
    jax.block_until_ready((out_full, out_info))
    assert out_full.shape == (batch, 1, 1, 1)
    assert out_info.shape == (batch, 2 * num_channels, side // 4, side // 4)
    assert jnp.allclose(out_full, ref_full, atol=1e-1, rtol=1e-1)
    assert jnp.allclose(out_info, ref_info, atol=1e-1, rtol=1e-1)

    print("KERNEL_OK")
</pallas_src>

<mosaic_0001>
module attributes {stable_mosaic.version = 11 : i64} {
  func.func @_fused_disc_kernel(%arg0: i32, %arg1: memref<2x64xf32, #tpu.memory_space<vmem>>, %arg2: memref<64x64xf32, #tpu.memory_space<vmem>>, %arg3: memref<1x64xf32, #tpu.memory_space<vmem>>, %arg4: memref<1x64xf32, #tpu.memory_space<vmem>>, %arg5: memref<64x32xf32, #tpu.memory_space<vmem>>, %arg6: memref<1x32xf32, #tpu.memory_space<vmem>>, %arg7: memref<1x32xf32, #tpu.memory_space<vmem>>, %arg8: memref<1x32xf32, #tpu.memory_space<vmem>>, %arg9: memref<1x1xf32, #tpu.memory_space<vmem>>, %arg10: memref<2x1xf32, #tpu.memory_space<vmem>>, %arg11: memref<2x32xf32, #tpu.memory_space<vmem>>) attributes {dimension_semantics = [#tpu.dimension_semantics<parallel>], iteration_bounds = array<i64: 1>, scalar_prefetch = 0 : i64, scratch_operands = 0 : i64, tpu.core_type = #tpu.core_type<tc>, window_params = [{transform_indices = @transform_0, window_bounds = array<i64: 2, 64>}, {pipeline_mode = #tpu.pipeline_mode<synchronous>, transform_indices = @transform_1, window_bounds = array<i64: 64, 64>}, {pipeline_mode = #tpu.pipeline_mode<synchronous>, transform_indices = @transform_2, window_bounds = array<i64: 1, 64>}, {pipeline_mode = #tpu.pipeline_mode<synchronous>, transform_indices = @transform_3, window_bounds = array<i64: 1, 64>}, {pipeline_mode = #tpu.pipeline_mode<synchronous>, transform_indices = @transform_4, window_bounds = array<i64: 64, 32>}, {pipeline_mode = #tpu.pipeline_mode<synchronous>, transform_indices = @transform_5, window_bounds = array<i64: 1, 32>}, {pipeline_mode = #tpu.pipeline_mode<synchronous>, transform_indices = @transform_6, window_bounds = array<i64: 1, 32>}, {pipeline_mode = #tpu.pipeline_mode<synchronous>, transform_indices = @transform_7, window_bounds = array<i64: 1, 32>}, {pipeline_mode = #tpu.pipeline_mode<synchronous>, transform_indices = @transform_8, window_bounds = array<i64: 1, 1>}, {transform_indices = @transform_9, window_bounds = array<i64: 2, 1>}, {transform_indices = @transform_10, window_bounds = array<i64: 2, 32>}]} {
    %c0 = arith.constant 0 : index
    %c0_0 = arith.constant 0 : index
    %0 = vector.load %arg1[%c0, %c0_0] : memref<2x64xf32, #tpu.memory_space<vmem>>, vector<2x64xf32>
    %c0_1 = arith.constant 0 : index
    %c0_2 = arith.constant 0 : index
    %1 = vector.load %arg2[%c0_1, %c0_2] : memref<64x64xf32, #tpu.memory_space<vmem>>, vector<64x64xf32>
    %cst = arith.constant dense<0.000000e+00> : vector<2x64xf32>
    %2 = tpu.matmul %0, %1, %cst {dimension_numbers = #tpu.dot_dimension_numbers<[1], [0], [0], [1], [0, 0, 1, 1], [], []>} : vector<2x64xf32>, vector<64x64xf32>, vector<2x64xf32> -> vector<2x64xf32>
    %cst_3 = arith.constant dense<0.000000e+00> : vector<2xf32>
    %3 = vector.multi_reduction <add>, %2, %cst_3 [1] : vector<2x64xf32> to vector<2xf32>
    %4 = vector.shape_cast %3 : vector<2xf32> to vector<2x1xf32>
    %cst_4 = arith.constant 6.400000e+01 : f32
    %5 = vector.broadcast %cst_4 : f32 to vector<2x1xf32>
    %6 = arith.divf %4, %5 : vector<2x1xf32>
    %7 = vector.broadcast %6 : vector<2x1xf32> to vector<2x64xf32>
    %8 = arith.subf %2, %7 : vector<2x64xf32>
    %9 = arith.mulf %8, %8 : vector<2x64xf32>
    %cst_5 = arith.constant dense<0.000000e+00> : vector<2xf32>
    %10 = vector.multi_reduction <add>, %9, %cst_5 [1] : vector<2x64xf32> to vector<2xf32>
    %11 = vector.shape_cast %10 : vector<2xf32> to vector<2x1xf32>
    %cst_6 = arith.constant 6.400000e+01 : f32
    %12 = vector.broadcast %cst_6 : f32 to vector<2x1xf32>
    %13 = arith.divf %11, %12 : vector<2x1xf32>
    %cst_7 = arith.constant 9.99999974E-6 : f32
    %14 = vector.broadcast %cst_7 : f32 to vector<2x1xf32>
    %15 = arith.addf %13, %14 : vector<2x1xf32>
    %16 = math.rsqrt %15 : vector<2x1xf32>
    %17 = vector.broadcast %16 : vector<2x1xf32> to vector<2x64xf32>
    %18 = arith.mulf %8, %17 : vector<2x64xf32>
    %c0_8 = arith.constant 0 : index
    %c0_9 = arith.constant 0 : index
    %19 = vector.load %arg3[%c0_8, %c0_9] : memref<1x64xf32, #tpu.memory_space<vmem>>, vector<1x64xf32>
    %20 = vector.broadcast %19 : vector<1x64xf32> to vector<2x64xf32>
    %21 = arith.mulf %18, %20 : vector<2x64xf32>
    %c0_10 = arith.constant 0 : index
    %c0_11 = arith.constant 0 : index
    %22 = vector.load %arg4[%c0_10, %c0_11] : memref<1x64xf32, #tpu.memory_space<vmem>>, vector<1x64xf32>
    %23 = vector.broadcast %22 : vector<1x64xf32> to vector<2x64xf32>
    %24 = arith.addf %21, %23 : vector<2x64xf32>
    %cst_12 = arith.constant 0.000000e+00 : f32
    %25 = vector.broadcast %cst_12 : f32 to vector<2x64xf32>
    %26 = arith.cmpf oge, %24, %25 : vector<2x64xf32>
    %cst_13 = arith.constant 2.000000e-01 : f32
    %27 = vector.broadcast %cst_13 : f32 to vector<2x64xf32>
    %28 = arith.mulf %27, %24 : vector<2x64xf32>
    %29 = arith.select %26, %24, %28 : vector<2x64xi1>, vector<2x64xf32>
    %c0_14 = arith.constant 0 : index
    %c0_15 = arith.constant 0 : index
    %30 = vector.load %arg5[%c0_14, %c0_15] : memref<64x32xf32, #tpu.memory_space<vmem>>, vector<64x32xf32>
    %cst_16 = arith.constant dense<0.000000e+00> : vector<2x32xf32>
    %31 = tpu.matmul %29, %30, %cst_16 {dimension_numbers = #tpu.dot_dimension_numbers<[1], [0], [0], [1], [0, 0, 1, 1], [], []>} : vector<2x64xf32>, vector<64x32xf32>, vector<2x32xf32> -> vector<2x32xf32>
    %cst_17 = arith.constant dense<0.000000e+00> : vector<2xf32>
    %32 = vector.multi_reduction <add>, %31, %cst_17 [1] : vector<2x32xf32> to vector<2xf32>
    %33 = vector.shape_cast %32 : vector<2xf32> to vector<2x1xf32>
    %cst_18 = arith.constant 3.200000e+01 : f32
    %34 = vector.broadcast %cst_18 : f32 to vector<2x1xf32>
    %35 = arith.divf %33, %34 : vector<2x1xf32>
    %36 = vector.broadcast %35 : vector<2x1xf32> to vector<2x32xf32>
    %37 = arith.subf %31, %36 : vector<2x32xf32>
    %38 = arith.mulf %37, %37 : vector<2x32xf32>
    %cst_19 = arith.constant dense<0.000000e+00> : vector<2xf32>
    %39 = vector.multi_reduction <add>, %38, %cst_19 [1] : vector<2x32xf32> to vector<2xf32>
    %40 = vector.shape_cast %39 : vector<2xf32> to vector<2x1xf32>
    %cst_20 = arith.constant 3.200000e+01 : f32
    %41 = vector.broadcast %cst_20 : f32 to vector<2x1xf32>
    %42 = arith.divf %40, %41 : vector<2x1xf32>
    %cst_21 = arith.constant 9.99999974E-6 : f32
    %43 = vector.broadcast %cst_21 : f32 to vector<2x1xf32>
    %44 = arith.addf %42, %43 : vector<2x1xf32>
    %45 = math.rsqrt %44 : vector<2x1xf32>
    %46 = vector.broadcast %45 : vector<2x1xf32> to vector<2x32xf32>
    %47 = arith.mulf %37, %46 : vector<2x32xf32>
    %c0_22 = arith.constant 0 : index
    %c0_23 = arith.constant 0 : index
    %48 = vector.load %arg6[%c0_22, %c0_23] : memref<1x32xf32, #tpu.memory_space<vmem>>, vector<1x32xf32>
    %49 = vector.broadcast %48 : vector<1x32xf32> to vector<2x32xf32>
    %50 = arith.mulf %47, %49 : vector<2x32xf32>
    %c0_24 = arith.constant 0 : index
    %c0_25 = arith.constant 0 : index
    %51 = vector.load %arg7[%c0_24, %c0_25] : memref<1x32xf32, #tpu.memory_space<vmem>>, vector<1x32xf32>
    %52 = vector.broadcast %51 : vector<1x32xf32> to vector<2x32xf32>
    %53 = arith.addf %50, %52 : vector<2x32xf32>
    %c0_26 = arith.constant 0 : index
    %c0_27 = arith.constant 0 : index
    %54 = vector.load %arg11[%c0_26, %c0_27] : memref<2x32xf32, #tpu.memory_space<vmem>>, vector<2x32xf32>
    tpu.vector_store %arg11[%c0_26, %c0_27], %53 {strides = array<i32>} : memref<2x32xf32, #tpu.memory_space<vmem>>, vector<2x32xf32>,
    %cst_28 = arith.constant 0.000000e+00 : f32
    %55 = vector.broadcast %cst_28 : f32 to vector<2x32xf32>
    %56 = arith.cmpf oge, %53, %55 : vector<2x32xf32>
    %cst_29 = arith.constant 2.000000e-01 : f32
    %57 = vector.broadcast %cst_29 : f32 to vector<2x32xf32>
    %58 = arith.mulf %57, %53 : vector<2x32xf32>
    %59 = arith.select %56, %53, %58 : vector<2x32xi1>, vector<2x32xf32>
    %c0_30 = arith.constant 0 : index
    %c0_31 = arith.constant 0 : index
    %60 = vector.load %arg8[%c0_30, %c0_31] : memref<1x32xf32, #tpu.memory_space<vmem>>, vector<1x32xf32>
    %61 = vector.broadcast %60 : vector<1x32xf32> to vector<2x32xf32>
    %62 = arith.mulf %59, %61 : vector<2x32xf32>
    %cst_32 = arith.constant dense<0.000000e+00> : vector<2xf32>
    %63 = vector.multi_reduction <add>, %62, %cst_32 [1] : vector<2x32xf32> to vector<2xf32>
    %64 = vector.shape_cast %63 : vector<2xf32> to vector<2x1xf32>
    %c0_33 = arith.constant 0 : index
    %c0_34 = arith.constant 0 : index
    %65 = vector.load %arg9[%c0_33, %c0_34] : memref<1x1xf32, #tpu.memory_space<vmem>>, vector<1x1xf32>
    %66 = vector.broadcast %65 : vector<1x1xf32> to vector<2x1xf32>
    %67 = arith.addf %64, %66 : vector<2x1xf32>
    %c0_35 = arith.constant 0 : index
    %c0_36 = arith.constant 0 : index
    %68 = vector.load %arg10[%c0_35, %c0_36] : memref<2x1xf32, #tpu.memory_space<vmem>>, vector<2x1xf32>
    tpu.vector_store %arg10[%c0_35, %c0_36], %67 {strides = array<i32>} : memref<2x1xf32, #tpu.memory_space<vmem>>, vector<2x1xf32>,
    return
  }
  func.func @transform_0(%arg0: i32) -> (i32, i32) {
    %c0_i32 = arith.constant 0 : i32
    %c0_i32_0 = arith.constant 0 : i32
    return %arg0, %c0_i32 : i32, i32
  }
  func.func @transform_1(%arg0: i32) -> (i32, i32) {
    %c0_i32 = arith.constant 0 : i32
    %c0_i32_0 = arith.constant 0 : i32
    %c0_i32_1 = arith.constant 0 : i32
    return %c0_i32, %c0_i32_0 : i32, i32
  }
  func.func @transform_2(%arg0: i32) -> (i32, i32) {
    %c0_i32 = arith.constant 0 : i32
    %c0_i32_0 = arith.constant 0 : i32
    %c0_i32_1 = arith.constant 0 : i32
    return %c0_i32, %c0_i32_0 : i32, i32
  }
  func.func @transform_3(%arg0: i32) -> (i32, i32) {
    %c0_i32 = arith.constant 0 : i32
    %c0_i32_0 = arith.constant 0 : i32
    %c0_i32_1 = arith.constant 0 : i32
    return %c0_i32, %c0_i32_0 : i32, i32
  }
  func.func @transform_4(%arg0: i32) -> (i32, i32) {
    %c0_i32 = arith.constant 0 : i32
    %c0_i32_0 = arith.constant 0 : i32
    %c0_i32_1 = arith.constant 0 : i32
    return %c0_i32, %c0_i32_0 : i32, i32
  }
  func.func @transform_5(%arg0: i32) -> (i32, i32) {
    %c0_i32 = arith.constant 0 : i32
    %c0_i32_0 = arith.constant 0 : i32
    %c0_i32_1 = arith.constant 0 : i32
    return %c0_i32, %c0_i32_0 : i32, i32
  }
  func.func @transform_6(%arg0: i32) -> (i32, i32) {
    %c0_i32 = arith.constant 0 : i32
    %c0_i32_0 = arith.constant 0 : i32
    %c0_i32_1 = arith.constant 0 : i32
    return %c0_i32, %c0_i32_0 : i32, i32
  }
  func.func @transform_7(%arg0: i32) -> (i32, i32) {
    %c0_i32 = arith.constant 0 : i32
    %c0_i32_0 = arith.constant 0 : i32
    %c0_i32_1 = arith.constant 0 : i32
    return %c0_i32, %c0_i32_0 : i32, i32
  }
  func.func @transform_8(%arg0: i32) -> (i32, i32) {
    %c0_i32 = arith.constant 0 : i32
    %c0_i32_0 = arith.constant 0 : i32
    %c0_i32_1 = arith.constant 0 : i32
    return %c0_i32, %c0_i32_0 : i32, i32
  }
  func.func @transform_9(%arg0: i32) -> (i32, i32) {
    %c0_i32 = arith.constant 0 : i32
    %c0_i32_0 = arith.constant 0 : i32
    return %arg0, %c0_i32 : i32, i32
  }
  func.func @transform_10(%arg0: i32) -> (i32, i32) {
    %c0_i32 = arith.constant 0 : i32
    %c0_i32_0 = arith.constant 0 : i32
    return %arg0, %c0_i32 : i32, i32
  }
}

</mosaic_0001>

<llo_original>
// kernel: discriminator_forward.1
$region0: #{discriminator_forward.1}
  #allocation0 [shape = 'u32[]', space=smem, size = 0x4, offset = 0x4, fixed_abs, tag = 'smem constant byte address 0x4 - core index']
  #allocation1 [shape = 'u32[144,128]{1,0:T(1,128)}', space=vmem, size = 0x12000, scoped, tag = 'internal scratch']
  #allocation2 [shape = 'f32[1,1]{1,0:T(1,128)S(1)}', space=vmem, size = 0x200, scoped, tag = 'scoped memory for discriminator_forward.1']
  %s0 = inlined_call_operand.vmem [shape: f32[2,64], index: 0, kind: input, shape index: {}]
  %s1 = inlined_call_operand.vmem [shape: f32[64,64], index: 1, kind: input, shape index: {}]
  %s2 = inlined_call_operand.vmem [shape: f32[1,64], index: 2, kind: input, shape index: {}]
  %s3 = inlined_call_operand.vmem [shape: f32[1,64], index: 3, kind: input, shape index: {}]
  %s4 = inlined_call_operand.vmem [shape: f32[64,32], index: 4, kind: input, shape index: {}]
  %s5 = inlined_call_operand.vmem [shape: f32[1,32], index: 5, kind: input, shape index: {}]
  %s6 = inlined_call_operand.vmem [shape: f32[1,32], index: 6, kind: input, shape index: {}]
  %s7 = inlined_call_operand.vmem [shape: f32[1,32], index: 7, kind: input, shape index: {}]
  %s8 = inlined_call_operand.<no memory space> [shape: f32[1,1], index: 8, kind: input, shape index: {}]
  %s9 = inlined_call_operand.vmem [shape: f32[2,1], index: 9, kind: output, shape index: {0}]
  %s10 = inlined_call_operand.vmem [shape: f32[2,32], index: 10, kind: output, shape index: {1}]
  %11 = xla_tuple %s9, %s10
  %s12 = sld [smem:[#allocation0]]
  $region54: #{discriminator_forward.1} parent=0
    _
  %s14 = ssub.s32 1, %s12
  %s15 = scalar_select 0, %s14, %s12
  %v16 = vstv %s8
  %17 = vst [vmem:[#allocation2] sm:$0x1] %v16
  // Predicated region
  $region2: #{discriminator_forward.1} parent=0 // pred_check
    _
  $region3: #{discriminator_forward.1} parent=0 // pred_check_branch
    %19 = sbr.rel (0) target = $region5
  $region4: #{discriminator_forward.1} parent=0 // pred_region
    _
  $region5: #{discriminator_forward.1} parent=0 // pred_fallthru
    _
  // Predicated region
  $region6: #{discriminator_forward.1} parent=0 // pred_check
    _
  $region7: #{discriminator_forward.1} parent=0 // pred_check_branch
    %21 = sbr.rel (0) target = $region9
  $region8: #{discriminator_forward.1} parent=0 // pred_region
    _
  $region9: #{discriminator_forward.1} parent=0 // pred_fallthru
    _
  // Predicated region
  $region10: #{discriminator_forward.1} parent=0 // pred_check
    _
  $region11: #{discriminator_forward.1} parent=0 // pred_check_branch
    %23 = sbr.rel (0) target = $region13
  $region12: #{discriminator_forward.1} parent=0 // pred_region
    _
  $region13: #{discriminator_forward.1} parent=0 // pred_fallthru
    _
  // Predicated region
  $region14: #{discriminator_forward.1} parent=0 // pred_check
    _
  $region15: #{discriminator_forward.1} parent=0 // pred_check_branch
    %25 = sbr.rel (0) target = $region17
  $region16: #{discriminator_forward.1} parent=0 // pred_region
    _
  $region17: #{discriminator_forward.1} parent=0 // pred_fallthru
    _
  // Predicated region
  $region18: #{discriminator_forward.1} parent=0 // pred_check
    _
  $region19: #{discriminator_forward.1} parent=0 // pred_check_branch
    %27 = sbr.rel (0) target = $region21
  $region20: #{discriminator_forward.1} parent=0 // pred_region
    _
  $region21: #{discriminator_forward.1} parent=0 // pred_fallthru
    _
  // Predicated region
  $region22: #{discriminator_forward.1} parent=0 // pred_check
    _
  $region23: #{discriminator_forward.1} parent=0 // pred_check_branch
    %29 = sbr.rel (0) target = $region25
  $region24: #{discriminator_forward.1} parent=0 // pred_region
    _
  $region25: #{discriminator_forward.1} parent=0 // pred_fallthru
    _
  // Predicated region
  $region26: #{discriminator_forward.1} parent=0 // pred_check
    _
  $region27: #{discriminator_forward.1} parent=0 // pred_check_branch
    %31 = sbr.rel (0) target = $region29
  $region28: #{discriminator_forward.1} parent=0 // pred_region
    _
  $region29: #{discriminator_forward.1} parent=0 // pred_fallthru
    _
  // Predicated region
  $region30: #{discriminator_forward.1} parent=0 // pred_check
    _
  $region31: #{discriminator_forward.1} parent=0 // pred_check_branch
    %33 = sbr.rel (0) target = $region33
  $region32: #{discriminator_forward.1} parent=0 // pred_region
    _
  $region33: #{discriminator_forward.1} parent=0 // pred_fallthru
    _
  // Predicated region
  $region34: #{discriminator_forward.1} parent=0 // pred_check
    _
  $region35: #{discriminator_forward.1} parent=0 // pred_check_branch
    %35 = sbr.rel (0) target = $region37
  $region36: #{discriminator_forward.1} parent=0 // pred_region
    _
  $region37: #{discriminator_forward.1} parent=0 // pred_fallthru
    _
  %v36 = vld [vmem:[%s0] sm:$0x3]
  %v37 = vld [vmem:[%s1] sm:$0xff]
  %v38 = vld [vmem:[%s1 + $0x8] sm:$0xff]
  %v39 = vld [vmem:[%s1 + $0x10] sm:$0xff]
  %v40 = vld [vmem:[%s1 + $0x18] sm:$0xff]
  %v41 = vld [vmem:[%s1 + $0x20] sm:$0xff]
  %v42 = vld [vmem:[%s1 + $0x28] sm:$0xff]
  %v43 = vld [vmem:[%s1 + $0x30] sm:$0xff]
  %v44 = vld [vmem:[%s1 + $0x38] sm:$0xff]
  %vm45 = vcmask 523264
  %v47 = vsel %vm45, %v36, 0
  %49 = vmatprep.subr.mxu0 0.0
  %50 = vmatpush1.msra.mxu0 0.0
  %51 = vmatprep.subr.mxu0 0.0
  %52 = vmatpush1.msra.mxu0 0.0
  %53 = vmatprep.subr.mxu0 0.0
  %54 = vmatpush1.msra.mxu0 0.0
  %55 = vmatprep.subr.mxu0 0.0
  %56 = vmatpush1.msra.mxu0 0.0
  %57 = vmatprep.subr.mxu0 0.0
  %58 = vmatpush1.msra.mxu0 0.0
  %59 = vmatprep.subr.mxu0 0.0
  %60 = vmatpush1.msra.mxu0 0.0
  %61 = vmatprep.subr.mxu0 0.0
  %62 = vmatpush1.msra.mxu0 0.0
  %63 = vmatprep.subr.mxu0 0.0
  %64 = vmatpush1.msra.mxu0 0.0
  %65 = vmatprep.subr.mxu0 0.0
  %66 = vmatpush1.msra.mxu0 %v44
  %67 = vmatprep.subr.mxu0 0.0
  %68 = vmatpush1.msra.mxu0 %v43
  %69 = vmatprep.subr.mxu0 0.0
  %70 = vmatpush1.msra.mxu0 %v42
  %71 = vmatprep.subr.mxu0 0.0
  %72 = vmatpush1.msra.mxu0 %v41
  %73 = vmatprep.subr.mxu0 0.0
  %74 = vmatpush1.msra.mxu0 %v40
  %75 = vmatprep.subr.mxu0 0.0
  %76 = vmatpush1.msra.mxu0 %v39
  %77 = vmatprep.subr.mxu0 0.0
  %78 = vmatpush1.msra.mxu0 %v38
  %79 = vmatprep.subr.mxu0 0.0
  %80 = vmatpush1.msra.mxu0 %v37
  %81 = vmatprep.subr.mxu0 0.0
  %82 = vmatpush2.msra.mxu0 0.0
  %83 = vmatprep.subr.mxu0 0.0
  %84 = vmatpush2.msra.mxu0 0.0
  %85 = vmatprep.subr.mxu0 0.0
  %86 = vmatpush2.msra.mxu0 0.0
  %87 = vmatprep.subr.mxu0 0.0
  %88 = vmatpush2.msra.mxu0 0.0
  %89 = vmatprep.subr.mxu0 0.0
  %90 = vmatpush2.msra.mxu0 0.0
  %91 = vmatprep.subr.mxu0 0.0
  %92 = vmatpush2.msra.mxu0 0.0
  %93 = vmatprep.subr.mxu0 0.0
  %94 = vmatpush2.msra.mxu0 0.0
  %95 = vmatprep.subr.mxu0 0.0
  %96 = vmatpush2.msra.mxu0 0.0
  %97 = vmatprep.subr.mxu0 0.0
  %98 = vmatpush2.msra.mxu0 0.0
  %99 = vmatprep.subr.mxu0 0.0
  %100 = vmatpush2.msra.mxu0 0.0
  %101 = vmatprep.subr.mxu0 0.0
  %102 = vmatpush2.msra.mxu0 0.0
  %103 = vmatprep.subr.mxu0 0.0
  %104 = vmatpush2.msra.mxu0 0.0
  %105 = vmatprep.subr.mxu0 0.0
  %106 = vmatpush2.msra.mxu0 0.0
  %107 = vmatprep.subr.mxu0 0.0
  %108 = vmatpush2.msra.mxu0 0.0
  %109 = vmatprep.subr.mxu0 0.0
  %110 = vmatpush2.msra.mxu0 0.0
  %111 = vmatprep.subr.mxu0 0.0
  %112 = vmatpush2.msra.mxu0 0.0
  %113 = vmatprep.mubr.f32.mxu0 0.0
  %114 = vmatmul.mubr.f32.gmra.mxu0 %v47
  %v115 = vpop.f32.mrf.mxu0
  %v116 = vadd.f32 0.0, %v115
  %v117 = vpop.f32.mrf.mxu0
  %118 = vdwg.mxu0
  %vm119 = vcmask 517120
  %v120 = vsel %vm119, %v116, 0.0
  %121 = vadd.xlane.f32.xlu0 %v120
  %v122 = vpop.xlane.xlu0 %121
  %v123 = vrcp.pop 64.0
  %v124 = vmul.f32 %v122, %v123
  %v125 = vsub.f32 %v116, %v124
  %v126 = vmul.f32 %v125, %v125
  %v127 = vsel %vm119, %v126, 0.0
  %128 = vadd.xlane.f32.xlu0 %v127
  %v129 = vpop.xlane.xlu0 %128
  %v130 = vmul.f32 %v129, %v123
  %v131 = vadd.f32 %v130, 1e-05
  %v132 = vrsqrt.pop %v131
  %v133 = vmul.f32 %v125, %v132
  %v134 = vld [vmem:[%s2] sm:$0x1]
  %v136 = vlaneseq
  %v137 = vshrl.u32 %v136, 7
  %v138 = vsub.s32 0, %v137
  %v139 = vrot.slane %v134, %v138
  %v141 = vmul.f32 %v133, %v139
  %v142 = vld [vmem:[%s3] sm:$0x1]
  %v144 = vlaneseq
  %v145 = vshrl.u32 %v144, 7
  %v146 = vsub.s32 0, %v145
  %v147 = vrot.slane %v142, %v146
  %v149 = vadd.f32 %v141, %v147
  %vm150 = vcmp.ge.f32.partialorder %v149, 0.0
  %v151 = vmul.f32 %v149, 0.2
  %v152 = vsel %vm150, %v149, %v151
  %v153 = vld [vmem:[%s4] sm:$0xff]
  %v154 = vld [vmem:[%s4 + $0x8] sm:$0xff]
  %v155 = vld [vmem:[%s4 + $0x10] sm:$0xff]
  %v156 = vld [vmem:[%s4 + $0x18] sm:$0xff]
  %v157 = vld [vmem:[%s4 + $0x20] sm:$0xff]
  %v158 = vld [vmem:[%s4 + $0x28] sm:$0xff]
  %v159 = vld [vmem:[%s4 + $0x30] sm:$0xff]
  %v160 = vld [vmem:[%s4 + $0x38] sm:$0xff]
  %v162 = vsel %vm45, %v152, 0
  %164 = vmatprep.subr.mxu0 0.0
  %165 = vmatpush1.msra.mxu0 0.0
  %166 = vmatprep.subr.mxu0 0.0
  %167 = vmatpush1.msra.mxu0 0.0
  %168 = vmatprep.subr.mxu0 0.0
  %169 = vmatpush1.msra.mxu0 0.0
  %170 = vmatprep.subr.mxu0 0.0
  %171 = vmatpush1.msra.mxu0 0.0
  %172 = vmatprep.subr.mxu0 0.0
  %173 = vmatpush1.msra.mxu0 0.0
  %174 = vmatprep.subr.mxu0 0.0
  %175 = vmatpush1.msra.mxu0 0.0
  %176 = vmatprep.subr.mxu0 0.0
  %177 = vmatpush1.msra.mxu0 0.0
  %178 = vmatprep.subr.mxu0 0.0
  %179 = vmatpush1.msra.mxu0 0.0
  %180 = vmatprep.subr.mxu0 0.0
  %181 = vmatpush1.msra.mxu0 %v160
  %182 = vmatprep.subr.mxu0 0.0
  %183 = vmatpush1.msra.mxu0 %v159
  %184 = vmatprep.subr.mxu0 0.0
  %185 = vmatpush1.msra.mxu0 %v158
  %186 = vmatprep.subr.mxu0 0.0
  %187 = vmatpush1.msra.mxu0 %v157
  %188 = vmatprep.subr.mxu0 0.0
  %189 = vmatpush1.msra.mxu0 %v156
  %190 = vmatprep.subr.mxu0 0.0
  %191 = vmatpush1.msra.mxu0 %v155
  %192 = vmatprep.subr.mxu0 0.0
  %193 = vmatpush1.msra.mxu0 %v154
  %194 = vmatprep.subr.mxu0 0.0
  %195 = vmatpush1.msra.mxu0 %v153
  %196 = vmatprep.subr.mxu0 0.0
  %197 = vmatpush2.msra.mxu0 0.0
  %198 = vmatprep.subr.mxu0 0.0
  %199 = vmatpush2.msra.mxu0 0.0
  %200 = vmatprep.subr.mxu0 0.0
  %201 = vmatpush2.msra.mxu0 0.0
  %202 = vmatprep.subr.mxu0 0.0
  %203 = vmatpush2.msra.mxu0 0.0
  %204 = vmatprep.subr.mxu0 0.0
  %205 = vmatpush2.msra.mxu0 0.0
  %206 = vmatprep.subr.mxu0 0.0
  %207 = vmatpush2.msra.mxu0 0.0
  %208 = vmatprep.subr.mxu0 0.0
  %209 = vmatpush2.msra.mxu0 0.0
  %210 = vmatprep.subr.mxu0 0.0
  %211 = vmatpush2.msra.mxu0 0.0
  %212 = vmatprep.subr.mxu0 0.0
  %213 = vmatpush2.msra.mxu0 0.0
  %214 = vmatprep.subr.mxu0 0.0
  %215 = vmatpush2.msra.mxu0 0.0
  %216 = vmatprep.subr.mxu0 0.0
  %217 = vmatpush2.msra.mxu0 0.0
  %218 = vmatprep.subr.mxu0 0.0
  %219 = vmatpush2.msra.mxu0 0.0
  %220 = vmatprep.subr.mxu0 0.0
  %221 = vmatpush2.msra.mxu0 0.0
  %222 = vmatprep.subr.mxu0 0.0
  %223 = vmatpush2.msra.mxu0 0.0
  %224 = vmatprep.subr.mxu0 0.0
  %225 = vmatpush2.msra.mxu0 0.0
  %226 = vmatprep.subr.mxu0 0.0
  %227 = vmatpush2.msra.mxu0 0.0
  %228 = vmatprep.mubr.f32.mxu0 0.0
  %229 = vmatmul.mubr.f32.gmra.mxu0 %v162
  %v230 = vpop.f32.mrf.mxu0
  %v231 = vadd.f32 0.0, %v230
  %v232 = vpop.f32.mrf.mxu0
  %233 = vdwg.mxu0
  %vm234 = vcmask 254976
  %v235 = vsel %vm234, %v231, 0.0
  %236 = vadd.xlane.f32.xlu0 %v235
  %v237 = vpop.xlane.xlu0 %236
  %v238 = vrcp.pop 32.0
  %v239 = vmul.f32 %v237, %v238
  %v240 = vsub.f32 %v231, %v239
  %v241 = vmul.f32 %v240, %v240
  %v242 = vsel %vm234, %v241, 0.0
  %243 = vadd.xlane.f32.xlu0 %v242
  %v244 = vpop.xlane.xlu0 %243
  %v245 = vmul.f32 %v244, %v238
  %v246 = vadd.f32 %v245, 1e-05
  %v247 = vrsqrt.pop %v246
  %v248 = vmul.f32 %v240, %v247
  %v249 = vld [vmem:[%s5] sm:$0x1]
  %v251 = vlaneseq
  %v252 = vshrl.u32 %v251, 7
  %v253 = vsub.s32 0, %v252
  %v254 = vrot.slane %v249, %v253
  %v256 = vmul.f32 %v248, %v254
  %v257 = vld [vmem:[%s6] sm:$0x1]
  %v259 = vlaneseq
  %v260 = vshrl.u32 %v259, 7
  %v261 = vsub.s32 0, %v260
  %v262 = vrot.slane %v257, %v261
  %v264 = vadd.f32 %v256, %v262
  %265 = vst.msk [vmem:[%s10] sm:$0x3] %vm234, %v264
  %vm266 = vcmp.ge.f32.partialorder %v264, 0.0
  %v267 = vmul.f32 %v264, 0.2
  %v268 = vsel %vm266, %v264, %v267
  %v269 = vld [vmem:[%s7] sm:$0x1]
  %v271 = vlaneseq
  %v272 = vshrl.u32 %v271, 7
  %v273 = vsub.s32 0, %v272
  %v274 = vrot.slane %v269, %v273
  %v276 = vmul.f32 %v268, %v274
  %v277 = vsel %vm234, %v276, 0.0
  %278 = vadd.xlane.f32.xlu0 %v277
  %v279 = vpop.xlane.xlu0 %278
  %v280 = vld [vmem:[#allocation2] sm:$0x1]
  %v282 = vlaneseq
  %v283 = vshrl.u32 %v282, 7
  %v284 = vsub.s32 0, %v283
  %v285 = vrot.slane %v280, %v284
  %v287 = vadd.f32 %v279, %v285
  %vm288 = vcmask 1024
  %289 = vst.msk [vmem:[%s9] sm:$0x3] %vm288, %v287
  // Predicated region
  $region38: #{discriminator_forward.1} parent=0 // pred_check
    _
  $region39: #{discriminator_forward.1} parent=0 // pred_check_branch
    %291 = sbr.rel (0) target = $region41
  $region40: #{discriminator_forward.1} parent=0 // pred_region
    _
  $region41: #{discriminator_forward.1} parent=0 // pred_fallthru
    _
  // Predicated region
  $region42: #{discriminator_forward.1} parent=0 // pred_check
    _
  $region43: #{discriminator_forward.1} parent=0 // pred_check_branch
    %293 = sbr.rel (0) target = $region45
  $region44: #{discriminator_forward.1} parent=0 // pred_region
    _
  $region45: #{discriminator_forward.1} parent=0 // pred_fallthru
    _
  // Predicated region
  $region46: #{discriminator_forward.1} parent=0 // pred_check
    _
  $region47: #{discriminator_forward.1} parent=0 // pred_check_branch
    %295 = sbr.rel (0) target = $region49
  $region48: #{discriminator_forward.1} parent=0 // pred_region
    _
  $region49: #{discriminator_forward.1} parent=0 // pred_fallthru
    _
  // Predicated region
  $region50: #{discriminator_forward.1} parent=0 // pred_check
    _
  $region51: #{discriminator_forward.1} parent=0 // pred_check_branch
    %297 = sbr.rel (0) target = $region53
  $region52: #{discriminator_forward.1} parent=0 // pred_region
    _
  $region53: #{discriminator_forward.1} parent=0 // pred_fallthru
    _

</llo_original>
